<compile_context>
chip_gen: v5e
topology: v5e:2x2
jax: 0.10.0
libtpu: 0.0.40
codegen_flags: <defaults>
</compile_context>

<pallas_src>
import jax
import jax.numpy as jnp
from jax.experimental import pallas as pl
from jax.experimental.pallas import tpu as pltpu


def _round_up(x, m):
    return (x + m - 1) // m * m


def _make_kernel(H, L, VP, B):
    H2, H3 = 2 * H, 3 * H
    f32 = jnp.float32
    bf16 = jnp.bfloat16

    def kernel(
        hid0_ref,      # (1, H)   f32   initial hidden
        enc_ref,       # (L, H)   f32   encoder outputs
        emb_ref,       # (B, H)   bf16  host-gathered embedding rows (this block)
        w_attn_ref,    # (2H, L)  bf16  rows [emb ; hidden]
        w_comb_ref,    # (2H, H)  bf16  rows [emb ; attn_applied]
        w_gru_ref,     # (2H, 3H) bf16  rows [input ; hidden], cols [r|z|n]
        w_out_ref,     # (H, VP)  bf16  zero-padded vocab columns
        bias_ref,      # (5, BP)  f32   packed biases (padded vocab lanes = -1e30)
        logp_ref,      # (B, VP)  f32
        hout_ref,      # (B, HP)  f32   only [:, :H] is valid
        attnw_ref,     # (B, LP)  f32   only [:, :L] is valid
        h_scratch,     # VMEM (1, H) f32 hidden carried across grid blocks
    ):
        blk = pl.program_id(0)

        @pl.when(blk == 0)
        def _():
            h_scratch[...] = hid0_ref[...]

        # Loop-invariant loads (weights DMA'd once; index_maps are constant).
        enc = enc_ref[...]                     # (L, H)  f32
        w_attn_e = w_attn_ref[0:H, :]          # (H, L)  bf16
        w_attn_h = w_attn_ref[H:H2, :]
        w_comb_e = w_comb_ref[0:H, :]          # (H, H)
        w_comb_a = w_comb_ref[H:H2, :]
        w_gru_i = w_gru_ref[0:H, :]            # (H, 3H)
        w_gru_h = w_gru_ref[H:H2, :]
        w_out = w_out_ref[...]                 # (H, VP)
        b_attn = bias_ref[0:1, :L]
        b_comb = bias_ref[1:2, :H]
        b_gi = bias_ref[2:3, :H3]
        b_gh = bias_ref[3:4, :H3]
        b_out = bias_ref[4:5, :VP]

        h = h_scratch[...]                     # (1, H) f32

        # B is small and static -> unrolled; static slice indices throughout.
        for b in range(B):
            emb = emb_ref[b:b + 1, :]          # (1, H) bf16; dropout = identity
            h_bf = h.astype(bf16)

            # --- attn_weights = softmax(emb @ W_e + h @ W_h + b) -------------
            att = (jnp.dot(emb, w_attn_e, preferred_element_type=f32)
                   + jnp.dot(h_bf, w_attn_h, preferred_element_type=f32)
                   + b_attn)                                           # (1, L)
            m = jnp.max(att, axis=1, keepdims=True)
            e = jnp.exp(att - m)
            attn_w = e * pl.reciprocal(
                jnp.sum(e, axis=1, keepdims=True), approx=True)
            attnw_ref[b:b + 1, 0:L] = attn_w

            # --- attn_applied = attn_weights @ encoder_outputs ---------------
            attn_applied = jnp.dot(attn_w, enc,
                                   preferred_element_type=f32)         # (1, H)

            # --- x = relu(emb @ Wc_e + attn_applied @ Wc_a + b) --------------
            x = (jnp.dot(emb, w_comb_e, preferred_element_type=f32)
                 + jnp.dot(attn_applied.astype(bf16), w_comb_a,
                           preferred_element_type=f32)
                 + b_comb)
            x = jnp.maximum(x, 0.0)                                    # (1, H)

            # --- GRU cell (PyTorch gate order r, z, n) ------------------------
            gi = jnp.dot(x.astype(bf16), w_gru_i,
                         preferred_element_type=f32) + b_gi            # (1, 3H)
            gh = jnp.dot(h_bf, w_gru_h,
                         preferred_element_type=f32) + b_gh            # (1, 3H)
            r = 1.0 / (1.0 + jnp.exp(-(gi[:, 0:H] + gh[:, 0:H])))      # exact
            z = 1.0 / (1.0 + jnp.exp(-(gi[:, H:H2] + gh[:, H:H2])))    # exact
            n = jnp.tanh(gi[:, H2:] + r * gh[:, H2:])
            h = (1.0 - z) * n + z * h                                  # (1, H)
            hout_ref[b:b + 1, 0:H] = h

            # --- log_softmax(out(h)); padded vocab lanes masked via b_out ----
            logits = jnp.dot(h.astype(bf16), w_out,
                             preferred_element_type=f32) + b_out       # (1, VP)
            mo = jnp.max(logits, axis=1, keepdims=True)
            lse = jnp.log(jnp.sum(jnp.exp(logits - mo),
                                  axis=1, keepdims=True)) + mo
            logp_ref[b:b + 1, :] = logits - lse

        h_scratch[...] = h

    return kernel


def attn_decoder_forward(tokens, hidden, encoder_outputs, packed,
                         steps_per_block=8):
    """Run T teacher-forced decode steps inside ONE pallas_call.

    tokens: (T,) int32; hidden: (1,1,H) f32; encoder_outputs: (L,H) f32.
    T = 1 reproduces a single AttnDecoderRNN.forward.
    Returns (logp (T,V), hidden_per_step (T,H), attn_weights (T,L)).
    """
    H = hidden.shape[-1]
    L = encoder_outputs.shape[0]
    V = packed["V"]
    VP = packed["w_out"].shape[1]
    HP = _round_up(H, 128)
    LP = _round_up(L, 128)
    T = int(tokens.shape[0])

    B = max(1, min(T, steps_per_block))        # steps per grid iteration
    num_blocks = (T + B - 1) // B
    T_pad = num_blocks * B

    tokens = jnp.clip(tokens.astype(jnp.int32), 0, V - 1)   # bounds safety
    tokens = jnp.pad(tokens, (0, T_pad - T))                 # pad steps discarded
    emb_rows = packed["emb"][tokens]                         # (T_pad, H) bf16 host gather

    h0 = hidden.reshape(1, H).astype(jnp.float32)
    enc = encoder_outputs.astype(jnp.float32)

    def const_spec(arr):
        nd = arr.ndim
        return pl.BlockSpec(arr.shape, lambda i, _nd=nd: (0,) * _nd)

    in_specs = [
        const_spec(h0),
        const_spec(enc),
        pl.BlockSpec((B, H), lambda i: (i, 0)),   # per-block embedding rows
        const_spec(packed["w_attn"]),
        const_spec(packed["w_comb"]),
        const_spec(packed["w_gru"]),
        const_spec(packed["w_out"]),
        const_spec(packed["bias"]),
    ]
    out_shape = (
        jax.ShapeDtypeStruct((T_pad, VP), jnp.float32),   # padded log-probs
        jax.ShapeDtypeStruct((T_pad, HP), jnp.float32),   # hidden per step (padded)
        jax.ShapeDtypeStruct((T_pad, LP), jnp.float32),   # attn weights per step (padded)
    )
    out_specs = (
        pl.BlockSpec((B, VP), lambda i: (i, 0)),
        pl.BlockSpec((B, HP), lambda i: (i, 0)),
        pl.BlockSpec((B, LP), lambda i: (i, 0)),
    )

    kernel = _make_kernel(H, L, VP, B)
    logp_p, h_steps, attn_w = pl.pallas_call(
        kernel,
        grid=(num_blocks,),
        in_specs=in_specs,
        out_specs=out_specs,
        out_shape=out_shape,
        scratch_shapes=[pltpu.VMEM((1, H), jnp.float32)],
        compiler_params=pltpu.CompilerParams(
            dimension_semantics=("arbitrary",)),   # hidden-state carry across blocks
    )(h0, enc, emb_rows, packed["w_attn"], packed["w_comb"],
      packed["w_gru"], packed["w_out"], packed["bias"])

    return logp_p[:T, :V], h_steps[:T, :H], attn_w[:T, :L]


def init_params(key, hidden_size, output_size, max_length):
    """Kernel-ready packed parameters (weights bf16, biases f32).

    Weights are stored (in_features, out_features) = transpose of PyTorch Linear.
    """
    H, V, L = hidden_size, output_size, max_length
    VP = _round_up(V, 128)                      # lane-dense padded vocab
    BP = max(L, H, 3 * H, VP)
    keys = jax.random.split(key, 10)
    scale = 0.1

    def rnd(k, shape):
        return (scale * jax.random.normal(k, shape)).astype(jnp.float32)

    emb = rnd(keys[0], (V, H))
    w_attn = rnd(keys[1], (2 * H, L))           # rows [emb ; hidden]
    b_attn = rnd(keys[2], (L,))
    w_comb = rnd(keys[3], (2 * H, H))           # rows [emb ; attn_applied]
    b_comb = rnd(keys[4], (H,))
    w_gru = rnd(keys[5], (2 * H, 3 * H))        # rows [input ; hidden], cols [r|z|n]
    b_gi = rnd(keys[6], (3 * H,))
    b_gh = rnd(keys[7], (3 * H,))
    w_out = rnd(keys[8], (H, V))
    b_out = rnd(keys[9], (V,))

    def pad_row(v, fill=0.0):
        return jnp.concatenate(
            [v, jnp.full((BP - v.shape[0],), fill, jnp.float32)])

    bias = jnp.stack([
        pad_row(b_attn),
        pad_row(b_comb),
        pad_row(b_gi),
        pad_row(b_gh),
        pad_row(b_out, fill=-1e30),             # -inf mask for padded vocab lanes
    ])
    w_out_p = jnp.concatenate([w_out, jnp.zeros((H, VP - V), jnp.float32)], axis=1)

    return {
        "V": V,
        "emb": emb.astype(jnp.bfloat16),        # (V, H) — host-side row gather
        "w_attn": w_attn.astype(jnp.bfloat16),
        "w_comb": w_comb.astype(jnp.bfloat16),
        "w_gru": w_gru.astype(jnp.bfloat16),
        "w_out": w_out_p.astype(jnp.bfloat16),
        "bias": bias,
    }


def reference_step(token, h, encoder_outputs, p):
    """Pure-JAX f32 reference mirroring the PyTorch forward (eval mode)."""
    H = h.shape[-1]
    V = p["V"]
    emb = p["emb"].astype(jnp.float32)[token][None, :]
    w_attn = p["w_attn"].astype(jnp.float32)
    w_comb = p["w_comb"].astype(jnp.float32)
    w_gru = p["w_gru"].astype(jnp.float32)
    w_out = p["w_out"].astype(jnp.float32)[:, :V]
    bias = p["bias"]
    L = w_attn.shape[1]
    b_attn = bias[0, :L][None]
    b_comb = bias[1, :H][None]
    b_gi = bias[2, :3 * H][None]
    b_gh = bias[3, :3 * H][None]
    b_out = bias[4, :V][None]

    eh = jnp.concatenate([emb, h], axis=1)
    attn_w = jax.nn.softmax(eh @ w_attn + b_attn, axis=1)
    attn_applied = attn_w @ encoder_outputs
    x = jnp.maximum(jnp.concatenate([emb, attn_applied], axis=1) @ w_comb + b_comb, 0.0)
    gi = x @ w_gru[:H] + b_gi
    gh = h @ w_gru[H:] + b_gh
    r = jax.nn.sigmoid(gi[:, :H] + gh[:, :H])
    z = jax.nn.sigmoid(gi[:, H:2 * H] + gh[:, H:2 * H])
    n = jnp.tanh(gi[:, 2 * H:] + r * gh[:, 2 * H:])
    h_new = (1.0 - z) * n + z * h
    logp = jax.nn.log_softmax(h_new @ w_out + b_out, axis=1)
    return logp, h_new, attn_w


if __name__ == "__main__":
    hidden_size = 32
    output_size = 40
    max_length = 8

    key = jax.random.PRNGKey(0)
    pkey, hkey, ekey = jax.random.split(key, 3)

    params = init_params(pkey, hidden_size, output_size, max_length)
    hidden = (0.1 * jax.random.normal(hkey, (1, 1, hidden_size))).astype(jnp.float32)
    encoder_outputs = (0.1 * jax.random.normal(
        ekey, (max_length, hidden_size))).astype(jnp.float32)

    # --- single decode step (exact AttnDecoderRNN.forward semantics) ----------
    token = jnp.array([3], dtype=jnp.int32)
    logp, h_steps, attn_w = attn_decoder_forward(token, hidden, encoder_outputs, params)
    jax.block_until_ready((logp, h_steps, attn_w))

    logp_r, h_r, attn_r = reference_step(token[0], hidden.reshape(1, -1),
                                         encoder_outputs, params)
    # tolerances account for bf16 MXU operands + EUP approx softmax reciprocal
    assert jnp.allclose(logp[0:1], logp_r, atol=5e-3, rtol=5e-3)
    assert jnp.allclose(h_steps[0:1], h_r, atol=5e-3, rtol=5e-3)
    assert jnp.allclose(attn_w[0:1], attn_r, atol=5e-3, rtol=5e-3)

    # --- multi-step teacher-forced decode inside one pallas_call --------------
    tokens = jnp.array([3, 7, 1, 12, 39], dtype=jnp.int32)
    logp_m, h_m, attn_m = attn_decoder_forward(tokens, hidden, encoder_outputs, params)
    jax.block_until_ready((logp_m, h_m, attn_m))

    h_ref = hidden.reshape(1, -1)
    for s in range(tokens.shape[0]):
        lp_r, h_ref, aw_r = reference_step(tokens[s], h_ref, encoder_outputs, params)
        assert jnp.allclose(logp_m[s:s + 1], lp_r, atol=1e-2, rtol=1e-2)
        assert jnp.allclose(h_m[s:s + 1], h_ref, atol=1e-2, rtol=1e-2)
        assert jnp.allclose(attn_m[s:s + 1], aw_r, atol=1e-2, rtol=1e-2)

    print("KERNEL_OK")
</pallas_src>

<mosaic_0001>
module attributes {stable_mosaic.version = 11 : i64} {
  func.func @kernel(%arg0: i32, %arg1: memref<1x32xf32, #tpu.memory_space<vmem>>, %arg2: memref<8x32xf32, #tpu.memory_space<vmem>>, %arg3: memref<1x32xbf16, #tpu.memory_space<vmem>>, %arg4: memref<64x8xbf16, #tpu.memory_space<vmem>>, %arg5: memref<64x32xbf16, #tpu.memory_space<vmem>>, %arg6: memref<64x96xbf16, #tpu.memory_space<vmem>>, %arg7: memref<32x128xbf16, #tpu.memory_space<vmem>>, %arg8: memref<5x128xf32, #tpu.memory_space<vmem>>, %arg9: memref<1x128xf32, #tpu.memory_space<vmem>>, %arg10: memref<1x128xf32, #tpu.memory_space<vmem>>, %arg11: memref<1x128xf32, #tpu.memory_space<vmem>>, %arg12: memref<1x32xf32, #tpu.memory_space<vmem>>) attributes {dimension_semantics = [#tpu.dimension_semantics<arbitrary>], iteration_bounds = array<i64: 1>, scalar_prefetch = 0 : i64, scratch_operands = 1 : i64, tpu.core_type = #tpu.core_type<tc>, window_params = [{pipeline_mode = #tpu.pipeline_mode<synchronous>, transform_indices = @transform_0, window_bounds = array<i64: 1, 32>}, {pipeline_mode = #tpu.pipeline_mode<synchronous>, transform_indices = @transform_1, window_bounds = array<i64: 8, 32>}, {transform_indices = @transform_2, window_bounds = array<i64: 1, 32>}, {pipeline_mode = #tpu.pipeline_mode<synchronous>, transform_indices = @transform_3, window_bounds = array<i64: 64, 8>}, {pipeline_mode = #tpu.pipeline_mode<synchronous>, transform_indices = @transform_4, window_bounds = array<i64: 64, 32>}, {pipeline_mode = #tpu.pipeline_mode<synchronous>, transform_indices = @transform_5, window_bounds = array<i64: 64, 96>}, {pipeline_mode = #tpu.pipeline_mode<synchronous>, transform_indices = @transform_6, window_bounds = array<i64: 32, 128>}, {pipeline_mode = #tpu.pipeline_mode<synchronous>, transform_indices = @transform_7, window_bounds = array<i64: 5, 128>}, {transform_indices = @transform_8, window_bounds = array<i64: 1, 128>}, {transform_indices = @transform_9, window_bounds = array<i64: 1, 128>}, {transform_indices = @transform_10, window_bounds = array<i64: 1, 128>}]} {
    %c0_i32 = arith.constant 0 : i32
    %0 = arith.cmpi eq, %arg0, %c0_i32 : i32
    %1 = arith.extui %0 : i1 to i32
    %c0_i32_0 = arith.constant 0 : i32
    %2 = arith.cmpi ne, %1, %c0_i32_0 : i32
    scf.if %2 {
      %c0_52 = arith.constant 0 : index
      %c0_53 = arith.constant 0 : index
      %94 = vector.load %arg1[%c0_52, %c0_53] : memref<1x32xf32, #tpu.memory_space<vmem>>, vector<1x32xf32>
      %c0_54 = arith.constant 0 : index
      %c0_55 = arith.constant 0 : index
      %95 = vector.load %arg12[%c0_54, %c0_55] : memref<1x32xf32, #tpu.memory_space<vmem>>, vector<1x32xf32>
      tpu.vector_store %arg12[%c0_54, %c0_55], %94 {strides = array<i32>} : memref<1x32xf32, #tpu.memory_space<vmem>>, vector<1x32xf32>,
    } else {
    }
    %c0 = arith.constant 0 : index
    %c0_1 = arith.constant 0 : index
    %3 = vector.load %arg2[%c0, %c0_1] : memref<8x32xf32, #tpu.memory_space<vmem>>, vector<8x32xf32>
    %c0_2 = arith.constant 0 : index
    %c0_3 = arith.constant 0 : index
    %4 = vector.load %arg4[%c0_2, %c0_3] : memref<64x8xbf16, #tpu.memory_space<vmem>>, vector<32x8xbf16>
    %c32 = arith.constant 32 : index
    %c0_4 = arith.constant 0 : index
    %5 = vector.load %arg4[%c32, %c0_4] : memref<64x8xbf16, #tpu.memory_space<vmem>>, vector<32x8xbf16>
    %c0_5 = arith.constant 0 : index
    %c0_6 = arith.constant 0 : index
    %6 = vector.load %arg5[%c0_5, %c0_6] : memref<64x32xbf16, #tpu.memory_space<vmem>>, vector<32x32xbf16>
    %c32_7 = arith.constant 32 : index
    %c0_8 = arith.constant 0 : index
    %7 = vector.load %arg5[%c32_7, %c0_8] : memref<64x32xbf16, #tpu.memory_space<vmem>>, vector<32x32xbf16>
    %c0_9 = arith.constant 0 : index
    %c0_10 = arith.constant 0 : index
    %8 = vector.load %arg6[%c0_9, %c0_10] : memref<64x96xbf16, #tpu.memory_space<vmem>>, vector<32x96xbf16>
    %c32_11 = arith.constant 32 : index
    %c0_12 = arith.constant 0 : index
    %9 = vector.load %arg6[%c32_11, %c0_12] : memref<64x96xbf16, #tpu.memory_space<vmem>>, vector<32x96xbf16>
    %c0_13 = arith.constant 0 : index
    %c0_14 = arith.constant 0 : index
    %10 = vector.load %arg7[%c0_13, %c0_14] : memref<32x128xbf16, #tpu.memory_space<vmem>>, vector<32x128xbf16>
    %c0_15 = arith.constant 0 : index
    %c0_16 = arith.constant 0 : index
    %11 = vector.load %arg8[%c0_15, %c0_16] : memref<5x128xf32, #tpu.memory_space<vmem>>, vector<1x8xf32>
    %c1 = arith.constant 1 : index
    %c0_17 = arith.constant 0 : index
    %12 = vector.load %arg8[%c1, %c0_17] : memref<5x128xf32, #tpu.memory_space<vmem>>, vector<1x32xf32>
    %c2 = arith.constant 2 : index
    %c0_18 = arith.constant 0 : index
    %13 = vector.load %arg8[%c2, %c0_18] : memref<5x128xf32, #tpu.memory_space<vmem>>, vector<1x96xf32>
    %c3 = arith.constant 3 : index
    %c0_19 = arith.constant 0 : index
    %14 = vector.load %arg8[%c3, %c0_19] : memref<5x128xf32, #tpu.memory_space<vmem>>, vector<1x96xf32>
    %c4 = arith.constant 4 : index
    %c0_20 = arith.constant 0 : index
    %15 = vector.load %arg8[%c4, %c0_20] : memref<5x128xf32, #tpu.memory_space<vmem>>, vector<1x128xf32>
    %c0_21 = arith.constant 0 : index
    %c0_22 = arith.constant 0 : index
    %16 = vector.load %arg12[%c0_21, %c0_22] : memref<1x32xf32, #tpu.memory_space<vmem>>, vector<1x32xf32>
    %c0_23 = arith.constant 0 : index
    %c0_24 = arith.constant 0 : index
    %17 = vector.load %arg3[%c0_23, %c0_24] : memref<1x32xbf16, #tpu.memory_space<vmem>>, vector<1x32xbf16>
    %18 = arith.truncf %16 : vector<1x32xf32> to vector<1x32xbf16>
    %cst = arith.constant dense<0.000000e+00> : vector<1x8xf32>
    %19 = tpu.matmul %17, %4, %cst {dimension_numbers = #tpu.dot_dimension_numbers<[1], [0], [0], [1], [0, 0, 1, 1], [], []>} : vector<1x32xbf16>, vector<32x8xbf16>, vector<1x8xf32> -> vector<1x8xf32>
    %cst_25 = arith.constant dense<0.000000e+00> : vector<1x8xf32>
    %20 = tpu.matmul %18, %5, %cst_25 {dimension_numbers = #tpu.dot_dimension_numbers<[1], [0], [0], [1], [0, 0, 1, 1], [], []>} : vector<1x32xbf16>, vector<32x8xbf16>, vector<1x8xf32> -> vector<1x8xf32>
    %21 = arith.addf %19, %20 : vector<1x8xf32>
    %22 = arith.addf %21, %11 : vector<1x8xf32>
    %cst_26 = arith.constant dense<0xFF800000> : vector<1xf32>
    %23 = vector.multi_reduction <maximumf>, %22, %cst_26 [1] : vector<1x8xf32> to vector<1xf32>
    %24 = vector.shape_cast %23 : vector<1xf32> to vector<1x1xf32>
    %25 = vector.broadcast %24 : vector<1x1xf32> to vector<1x8xf32>
    %26 = arith.subf %22, %25 : vector<1x8xf32>
    %27 = math.exp %26 : vector<1x8xf32>
    %cst_27 = arith.constant dense<0.000000e+00> : vector<1xf32>
    %28 = vector.multi_reduction <add>, %27, %cst_27 [1] : vector<1x8xf32> to vector<1xf32>
    %29 = vector.shape_cast %28 : vector<1xf32> to vector<1x1xf32>
    %30 = tpu.reciprocal %29 {approx = true} : vector<1x1xf32> -> vector<1x1xf32>
    %31 = vector.broadcast %30 : vector<1x1xf32> to vector<1x8xf32>
    %32 = arith.mulf %27, %31 : vector<1x8xf32>
    %c0_28 = arith.constant 0 : index
    %c0_29 = arith.constant 0 : index
    %33 = vector.load %arg11[%c0_28, %c0_29] : memref<1x128xf32, #tpu.memory_space<vmem>>, vector<1x8xf32>
    tpu.vector_store %arg11[%c0_28, %c0_29], %32 {strides = array<i32>} : memref<1x128xf32, #tpu.memory_space<vmem>>, vector<1x8xf32>,
    %cst_30 = arith.constant dense<0.000000e+00> : vector<1x32xf32>
    %34 = tpu.matmul %32, %3, %cst_30 {dimension_numbers = #tpu.dot_dimension_numbers<[1], [0], [0], [1], [0, 0, 1, 1], [], []>} : vector<1x8xf32>, vector<8x32xf32>, vector<1x32xf32> -> vector<1x32xf32>
    %cst_31 = arith.constant dense<0.000000e+00> : vector<1x32xf32>
    %35 = tpu.matmul %17, %6, %cst_31 {dimension_numbers = #tpu.dot_dimension_numbers<[1], [0], [0], [1], [0, 0, 1, 1], [], []>} : vector<1x32xbf16>, vector<32x32xbf16>, vector<1x32xf32> -> vector<1x32xf32>
    %36 = arith.truncf %34 : vector<1x32xf32> to vector<1x32xbf16>
    %cst_32 = arith.constant dense<0.000000e+00> : vector<1x32xf32>
    %37 = tpu.matmul %36, %7, %cst_32 {dimension_numbers = #tpu.dot_dimension_numbers<[1], [0], [0], [1], [0, 0, 1, 1], [], []>} : vector<1x32xbf16>, vector<32x32xbf16>, vector<1x32xf32> -> vector<1x32xf32>
    %38 = arith.addf %35, %37 : vector<1x32xf32>
    %39 = arith.addf %38, %12 : vector<1x32xf32>
    %cst_33 = arith.constant 0.000000e+00 : f32
    %40 = vector.broadcast %cst_33 : f32 to vector<1x32xf32>
    %41 = arith.maximumf %39, %40 : vector<1x32xf32>
    %42 = arith.truncf %41 : vector<1x32xf32> to vector<1x32xbf16>
    %cst_34 = arith.constant dense<0.000000e+00> : vector<1x96xf32>
    %43 = tpu.matmul %42, %8, %cst_34 {dimension_numbers = #tpu.dot_dimension_numbers<[1], [0], [0], [1], [0, 0, 1, 1], [], []>} : vector<1x32xbf16>, vector<32x96xbf16>, vector<1x96xf32> -> vector<1x96xf32>
    %44 = arith.addf %43, %13 : vector<1x96xf32>
    %cst_35 = arith.constant dense<0.000000e+00> : vector<1x96xf32>
    %45 = tpu.matmul %18, %9, %cst_35 {dimension_numbers = #tpu.dot_dimension_numbers<[1], [0], [0], [1], [0, 0, 1, 1], [], []>} : vector<1x32xbf16>, vector<32x96xbf16>, vector<1x96xf32> -> vector<1x96xf32>
    %46 = arith.addf %45, %14 : vector<1x96xf32>
    %47 = vector.extract_strided_slice %44 {offsets = [0, 0], sizes = [1, 32], strides = [1, 1]} : vector<1x96xf32> to vector<1x32xf32>
    %48 = vector.extract_strided_slice %46 {offsets = [0, 0], sizes = [1, 32], strides = [1, 1]} : vector<1x96xf32> to vector<1x32xf32>
    %49 = arith.addf %47, %48 : vector<1x32xf32>
    %cst_36 = arith.constant 0.000000e+00 : f32
    %50 = vector.broadcast %cst_36 : f32 to vector<1x32xf32>
    %51 = arith.subf %50, %49 : vector<1x32xf32>
    %52 = math.exp %51 : vector<1x32xf32>
    %cst_37 = arith.constant 1.000000e+00 : f32
    %53 = vector.broadcast %cst_37 : f32 to vector<1x32xf32>
    %54 = arith.addf %53, %52 : vector<1x32xf32>
    %cst_38 = arith.constant 1.000000e+00 : f32
    %55 = vector.broadcast %cst_38 : f32 to vector<1x32xf32>
    %56 = arith.divf %55, %54 : vector<1x32xf32>
    %57 = vector.extract_strided_slice %44 {offsets = [0, 32], sizes = [1, 32], strides = [1, 1]} : vector<1x96xf32> to vector<1x32xf32>
    %58 = vector.extract_strided_slice %46 {offsets = [0, 32], sizes = [1, 32], strides = [1, 1]} : vector<1x96xf32> to vector<1x32xf32>
    %59 = arith.addf %57, %58 : vector<1x32xf32>
    %cst_39 = arith.constant 0.000000e+00 : f32
    %60 = vector.broadcast %cst_39 : f32 to vector<1x32xf32>
    %61 = arith.subf %60, %59 : vector<1x32xf32>
    %62 = math.exp %61 : vector<1x32xf32>
    %cst_40 = arith.constant 1.000000e+00 : f32
    %63 = vector.broadcast %cst_40 : f32 to vector<1x32xf32>
    %64 = arith.addf %63, %62 : vector<1x32xf32>
    %cst_41 = arith.constant 1.000000e+00 : f32
    %65 = vector.broadcast %cst_41 : f32 to vector<1x32xf32>
    %66 = arith.divf %65, %64 : vector<1x32xf32>
    %67 = vector.extract_strided_slice %44 {offsets = [0, 64], sizes = [1, 32], strides = [1, 1]} : vector<1x96xf32> to vector<1x32xf32>
    %68 = vector.extract_strided_slice %46 {offsets = [0, 64], sizes = [1, 32], strides = [1, 1]} : vector<1x96xf32> to vector<1x32xf32>
    %69 = arith.mulf %56, %68 : vector<1x32xf32>
    %70 = arith.addf %67, %69 : vector<1x32xf32>
    %71 = math.tanh %70 : vector<1x32xf32>
    %cst_42 = arith.constant 1.000000e+00 : f32
    %72 = vector.broadcast %cst_42 : f32 to vector<1x32xf32>
    %73 = arith.subf %72, %66 : vector<1x32xf32>
    %74 = arith.mulf %73, %71 : vector<1x32xf32>
    %75 = arith.mulf %66, %16 : vector<1x32xf32>
    %76 = arith.addf %74, %75 : vector<1x32xf32>
    %c0_43 = arith.constant 0 : index
    %c0_44 = arith.constant 0 : index
    %77 = vector.load %arg10[%c0_43, %c0_44] : memref<1x128xf32, #tpu.memory_space<vmem>>, vector<1x32xf32>
    tpu.vector_store %arg10[%c0_43, %c0_44], %76 {strides = array<i32>} : memref<1x128xf32, #tpu.memory_space<vmem>>, vector<1x32xf32>,
    %78 = arith.truncf %76 : vector<1x32xf32> to vector<1x32xbf16>
    %cst_45 = arith.constant dense<0.000000e+00> : vector<1x128xf32>
    %79 = tpu.matmul %78, %10, %cst_45 {dimension_numbers = #tpu.dot_dimension_numbers<[1], [0], [0], [1], [0, 0, 1, 1], [], []>} : vector<1x32xbf16>, vector<32x128xbf16>, vector<1x128xf32> -> vector<1x128xf32>
    %80 = arith.addf %79, %15 : vector<1x128xf32>
    %cst_46 = arith.constant dense<0xFF800000> : vector<1xf32>
    %81 = vector.multi_reduction <maximumf>, %80, %cst_46 [1] : vector<1x128xf32> to vector<1xf32>
    %82 = vector.shape_cast %81 : vector<1xf32> to vector<1x1xf32>
    %83 = vector.broadcast %82 : vector<1x1xf32> to vector<1x128xf32>
    %84 = arith.subf %80, %83 : vector<1x128xf32>
    %85 = math.exp %84 : vector<1x128xf32>
    %cst_47 = arith.constant dense<0.000000e+00> : vector<1xf32>
    %86 = vector.multi_reduction <add>, %85, %cst_47 [1] : vector<1x128xf32> to vector<1xf32>
    %87 = vector.shape_cast %86 : vector<1xf32> to vector<1x1xf32>
    %88 = math.log %87 : vector<1x1xf32>
    %89 = arith.addf %88, %82 : vector<1x1xf32>
    %90 = vector.broadcast %89 : vector<1x1xf32> to vector<1x128xf32>
    %91 = arith.subf %80, %90 : vector<1x128xf32>
    %c0_48 = arith.constant 0 : index
    %c0_49 = arith.constant 0 : index
    %92 = vector.load %arg9[%c0_48, %c0_49] : memref<1x128xf32, #tpu.memory_space<vmem>>, vector<1x128xf32>
    tpu.vector_store %arg9[%c0_48, %c0_49], %91 {strides = array<i32>} : memref<1x128xf32, #tpu.memory_space<vmem>>, vector<1x128xf32>,
    %c0_50 = arith.constant 0 : index
    %c0_51 = arith.constant 0 : index
    %93 = vector.load %arg12[%c0_50, %c0_51] : memref<1x32xf32, #tpu.memory_space<vmem>>, vector<1x32xf32>
    tpu.vector_store %arg12[%c0_50, %c0_51], %76 {strides = array<i32>} : memref<1x32xf32, #tpu.memory_space<vmem>>, vector<1x32xf32>,
    return
  }
  func.func @transform_0(%arg0: i32) -> (i32, i32) {
    %c0_i32 = arith.constant 0 : i32
    %c0_i32_0 = arith.constant 0 : i32
    %c0_i32_1 = arith.constant 0 : i32
    return %c0_i32, %c0_i32_0 : i32, i32
  }
  func.func @transform_1(%arg0: i32) -> (i32, i32) {
    %c0_i32 = arith.constant 0 : i32
    %c0_i32_0 = arith.constant 0 : i32
    %c0_i32_1 = arith.constant 0 : i32
    return %c0_i32, %c0_i32_0 : i32, i32
  }
  func.func @transform_2(%arg0: i32) -> (i32, i32) {
    %c0_i32 = arith.constant 0 : i32
    %c0_i32_0 = arith.constant 0 : i32
    return %arg0, %c0_i32 : i32, i32
  }
  func.func @transform_3(%arg0: i32) -> (i32, i32) {
    %c0_i32 = arith.constant 0 : i32
    %c0_i32_0 = arith.constant 0 : i32
    %c0_i32_1 = arith.constant 0 : i32
    return %c0_i32, %c0_i32_0 : i32, i32
  }
  func.func @transform_4(%arg0: i32) -> (i32, i32) {
    %c0_i32 = arith.constant 0 : i32
    %c0_i32_0 = arith.constant 0 : i32
    %c0_i32_1 = arith.constant 0 : i32
    return %c0_i32, %c0_i32_0 : i32, i32
  }
  func.func @transform_5(%arg0: i32) -> (i32, i32) {
    %c0_i32 = arith.constant 0 : i32
    %c0_i32_0 = arith.constant 0 : i32
    %c0_i32_1 = arith.constant 0 : i32
    return %c0_i32, %c0_i32_0 : i32, i32
  }
  func.func @transform_6(%arg0: i32) -> (i32, i32) {
    %c0_i32 = arith.constant 0 : i32
    %c0_i32_0 = arith.constant 0 : i32
    %c0_i32_1 = arith.constant 0 : i32
    return %c0_i32, %c0_i32_0 : i32, i32
  }
  func.func @transform_7(%arg0: i32) -> (i32, i32) {
    %c0_i32 = arith.constant 0 : i32
    %c0_i32_0 = arith.constant 0 : i32
    %c0_i32_1 = arith.constant 0 : i32
    return %c0_i32, %c0_i32_0 : i32, i32
  }
  func.func @transform_8(%arg0: i32) -> (i32, i32) {
    %c0_i32 = arith.constant 0 : i32
    %c0_i32_0 = arith.constant 0 : i32
    return %arg0, %c0_i32 : i32, i32
  }
  func.func @transform_9(%arg0: i32) -> (i32, i32) {
    %c0_i32 = arith.constant 0 : i32
    %c0_i32_0 = arith.constant 0 : i32
    return %arg0, %c0_i32 : i32, i32
  }
  func.func @transform_10(%arg0: i32) -> (i32, i32) {
    %c0_i32 = arith.constant 0 : i32
    %c0_i32_0 = arith.constant 0 : i32
    return %arg0, %c0_i32 : i32, i32
  }
}

</mosaic_0001>

<llo_original>
// kernel: tpu_custom_call.1
$region0: #{tpu_custom_call.1}
  #allocation0 [shape = 'u32[]', space=smem, size = 0x4, offset = 0x4, fixed_abs, tag = 'smem constant byte address 0x4 - core index']
  #allocation1 [shape = 'u32[72,128]{1,0:T(1,128)}', space=vmem, size = 0x9000, scoped, tag = 'internal scratch']
  #allocation2 [shape = 'f32[1,32]{1,0:T(1,128)}', space=vmem, size = 0x200, scoped, tag = 'scratch operand']
  %s0 = inlined_call_operand.vmem [shape: f32[1,32], index: 0, kind: input, shape index: {}]
  %s1 = inlined_call_operand.vmem [shape: f32[8,32], index: 1, kind: input, shape index: {}]
  %s2 = inlined_call_operand.vmem [shape: bf16[1,32], index: 2, kind: input, shape index: {}]
  %s3 = inlined_call_operand.vmem [shape: bf16[64,8], index: 3, kind: input, shape index: {}]
  %s4 = inlined_call_operand.vmem [shape: bf16[64,32], index: 4, kind: input, shape index: {}]
  %s5 = inlined_call_operand.vmem [shape: bf16[64,96], index: 5, kind: input, shape index: {}]
  %s6 = inlined_call_operand.vmem [shape: bf16[32,128], index: 6, kind: input, shape index: {}]
  %s7 = inlined_call_operand.vmem [shape: f32[5,128], index: 7, kind: input, shape index: {}]
  %s8 = inlined_call_operand.hbm [shape: f32[1,128], index: 8, kind: output, shape index: {0}]
  %s9 = inlined_call_operand.hbm [shape: f32[1,128], index: 9, kind: output, shape index: {1}]
  %s10 = inlined_call_operand.hbm [shape: f32[1,128], index: 10, kind: output, shape index: {2}]
  %11 = xla_tuple %s8, %s9, %s10
  %s12 = sld [smem:[#allocation0]]
  $region62: #{tpu_custom_call.1} parent=0
    _
  %s14 = ssub.s32 1, %s12
  %s15 = scalar_select 0, %s14, %s12
  $region1: #{tpu_custom_call.1} parent=0
    #allocation3 [shape = 'u8[512]{0}', space=vmem, size = 0x400, scoped, tag = 'output window, operand 0, single buffered']
    #allocation4 [shape = 's32[1]{0}', space=sflag, size = 0x4, scoped, tag = 'scoped memory for tpu_custom_call.1']
    #allocation5 [shape = 'u8[512]{0}', space=vmem, size = 0x400, scoped, tag = 'output window, operand 1, single buffered']
    #allocation6 [shape = 's32[1]{0}', space=sflag, size = 0x4, scoped, tag = 'scoped memory for tpu_custom_call.1']
    #allocation7 [shape = 'u8[512]{0}', space=vmem, size = 0x400, scoped, tag = 'output window, operand 2, single buffered']
    %16 = vsyncpa [#allocation4], 0
    %17 = vsyncpa [#allocation6], 0
    // Predicated region
    $region2: #{tpu_custom_call.1} parent=1 // pred_check
      _
    $region3: #{tpu_custom_call.1} parent=1 // pred_check_branch
      %19 = sbr.rel (0) target = $region5
    $region4: #{tpu_custom_call.1} parent=1 // pred_region
      _
    $region5: #{tpu_custom_call.1} parent=1 // pred_fallthru
      _
    // Predicated region
    $region6: #{tpu_custom_call.1} parent=1 // pred_check
      _
    $region7: #{tpu_custom_call.1} parent=1 // pred_check_branch
      %21 = sbr.rel (0) target = $region9
    $region8: #{tpu_custom_call.1} parent=1 // pred_region
      _
    $region9: #{tpu_custom_call.1} parent=1 // pred_fallthru
      _
    // Predicated region
    $region10: #{tpu_custom_call.1} parent=1 // pred_check
      _
    $region11: #{tpu_custom_call.1} parent=1 // pred_check_branch
      %23 = sbr.rel (0) target = $region13
    $region12: #{tpu_custom_call.1} parent=1 // pred_region
      _
    $region13: #{tpu_custom_call.1} parent=1 // pred_fallthru
      _
    // Predicated region
    $region14: #{tpu_custom_call.1} parent=1 // pred_check
      _
    $region15: #{tpu_custom_call.1} parent=1 // pred_check_branch
      %25 = sbr.rel (0) target = $region17
    $region16: #{tpu_custom_call.1} parent=1 // pred_region
      _
    $region17: #{tpu_custom_call.1} parent=1 // pred_fallthru
      _
    // Predicated region
    $region18: #{tpu_custom_call.1} parent=1 // pred_check
      _
    $region19: #{tpu_custom_call.1} parent=1 // pred_check_branch
      %27 = sbr.rel (0) target = $region21
    $region20: #{tpu_custom_call.1} parent=1 // pred_region
      _
    $region21: #{tpu_custom_call.1} parent=1 // pred_fallthru
      _
    // Predicated region
    $region22: #{tpu_custom_call.1} parent=1 // pred_check
      _
    $region23: #{tpu_custom_call.1} parent=1 // pred_check_branch
      %29 = sbr.rel (0) target = $region25
    $region24: #{tpu_custom_call.1} parent=1 // pred_region
      _
    $region25: #{tpu_custom_call.1} parent=1 // pred_fallthru
      _
    // Predicated region
    $region26: #{tpu_custom_call.1} parent=1 // pred_check
      _
    $region27: #{tpu_custom_call.1} parent=1 // pred_check_branch
      %31 = sbr.rel (0) target = $region29
    $region28: #{tpu_custom_call.1} parent=1 // pred_region
      _
    $region29: #{tpu_custom_call.1} parent=1 // pred_fallthru
      _
    // Predicated region
    $region30: #{tpu_custom_call.1} parent=1 // pred_check
      _
    $region31: #{tpu_custom_call.1} parent=1 // pred_check_branch
      %33 = sbr.rel (0) target = $region33
    $region32: #{tpu_custom_call.1} parent=1 // pred_region
      _
    $region33: #{tpu_custom_call.1} parent=1 // pred_fallthru
      _
    %p35 = scmp.eq.s32.totalorder 0, 0
    // Predicated region
    $region34: #{tpu_custom_call.1} parent=1 // pred_check
      %p36 = pneg %p35
    $region35: #{tpu_custom_call.1} parent=1 // pred_check_branch
      %38 = sbr.rel (%p36) target = $region37
    $region36: #{tpu_custom_call.1} parent=1 // pred_region
      %v39 = vld [vmem:[%s0] sm:$0x1]
      %vm40 = vcmask 253952
      %41 = vst.msk [vmem:[#allocation2] sm:$0x1] %vm40, %v39
    $region37: #{tpu_custom_call.1} parent=1 // pred_fallthru
      _
    %v42 = vld [vmem:[%s1] sm:$0xff]
    %v43 = vld [vmem:[%s3] sm:$0xf]
    %v44 = vld [vmem:[%s3 + $0x4] sm:$0xf]
    %v45 = vld [vmem:[%s3 + $0x8] sm:$0xf]
    %v46 = vld [vmem:[%s3 + $0xc] sm:$0xf]
    %v47 = vld [vmem:[%s3 + $0x10] sm:$0xf]
    %v48 = vld [vmem:[%s3 + $0x14] sm:$0xf]
    %v49 = vld [vmem:[%s3 + $0x18] sm:$0xf]
    %v50 = vld [vmem:[%s3 + $0x1c] sm:$0xf]
    %v51 = vld [vmem:[%s4] sm:$0xf]
    %v52 = vld [vmem:[%s4 + $0x4] sm:$0xf]
    %v53 = vld [vmem:[%s4 + $0x8] sm:$0xf]
    %v54 = vld [vmem:[%s4 + $0xc] sm:$0xf]
    %v55 = vld [vmem:[%s4 + $0x10] sm:$0xf]
    %v56 = vld [vmem:[%s4 + $0x14] sm:$0xf]
    %v57 = vld [vmem:[%s4 + $0x18] sm:$0xf]
    %v58 = vld [vmem:[%s4 + $0x1c] sm:$0xf]
    %v59 = vld [vmem:[%s5] sm:$0xf]
    %v60 = vld [vmem:[%s5 + $0x4] sm:$0xf]
    %v61 = vld [vmem:[%s5 + $0x8] sm:$0xf]
    %v62 = vld [vmem:[%s5 + $0xc] sm:$0xf]
    %v63 = vld [vmem:[%s5 + $0x10] sm:$0xf]
    %v64 = vld [vmem:[%s5 + $0x14] sm:$0xf]
    %v65 = vld [vmem:[%s5 + $0x18] sm:$0xf]
    %v66 = vld [vmem:[%s5 + $0x1c] sm:$0xf]
    %v67 = vld [vmem:[%s6] sm:$0xf]
    %v68 = vld [vmem:[%s6 + $0x4] sm:$0xf]
    %v69 = vld [vmem:[%s6 + $0x8] sm:$0xf]
    %v70 = vld [vmem:[%s6 + $0xc] sm:$0xf]
    %v71 = vld [vmem:[%s7] sm:$0x1]
    %v72 = vld [vmem:[%s7 + $0x1] sm:$0x1]
    %v73 = vld [vmem:[%s7 + $0x2] sm:$0x1]
    %v74 = vld [vmem:[%s7 + $0x3] sm:$0x1]
    %v75 = vld [vmem:[%s7 + $0x4] sm:$0x1]
    %v76 = vld [vmem:[#allocation2] sm:$0x1]
    %v77 = vld [vmem:[%s2] sm:$0x1]
    %v78 = vpack.c.bf16 %v76, %v76
    %v83 = vunpack.c.l.b16 %v47
    %v84 = vunpack.c.l.b16 %v48
    %v85 = vunpack.c.l.b16 %v49
    %v86 = vunpack.c.l.b16 %v50
    %v87 = vpack.c.b16 %v84, %v83
    %v88 = vpack.c.b16 %v86, %v85
    %vm91 = vcmask 261120
    %v93 = vsel %vm91, %v78, 0
    %95 = vmatpush.bf16.msra.mxu0 0
    %96 = vmatpush.bf16.msra.mxu0 0
    %97 = vmatpush.bf16.msra.mxu0 0
    %98 = vmatpush.bf16.msra.mxu0 0
    %99 = vmatpush.bf16.msra.mxu0 0
    %100 = vmatpush.bf16.msra.mxu0 0
    %101 = vmatpush.bf16.msra.mxu0 %v88
    %102 = vmatpush.bf16.msra.mxu0 %v87
    %103 = vmatmul.bf16.gmra.mxu0 %v93
    %v104 = vpop.f32.mrf.mxu0
    %v105 = vadd.f32 0.0, %v104
    %v106 = vpop.f32.mrf.mxu0
    %107 = vdwg.mxu0
    %v112 = vunpack.c.l.b16 %v43
    %v113 = vunpack.c.l.b16 %v44
    %v114 = vunpack.c.l.b16 %v45
    %v115 = vunpack.c.l.b16 %v46
    %v116 = vpack.c.b16 %v113, %v112
    %v117 = vpack.c.b16 %v115, %v114
    %v121 = vsel %vm91, %v77, 0
    %123 = vmatpush.bf16.msra.mxu0 0
    %124 = vmatpush.bf16.msra.mxu0 0
    %125 = vmatpush.bf16.msra.mxu0 0
    %126 = vmatpush.bf16.msra.mxu0 0
    %127 = vmatpush.bf16.msra.mxu0 0
    %128 = vmatpush.bf16.msra.mxu0 0
    %129 = vmatpush.bf16.msra.mxu0 %v117
    %130 = vmatpush.bf16.msra.mxu0 %v116
    %131 = vmatmul.bf16.gmra.mxu0 %v121
    %v132 = vpop.f32.mrf.mxu0
    %v133 = vadd.f32 %v105, %v132
    %v134 = vpop.f32.mrf.mxu0
    %135 = vdwg.mxu0
    %v136 = vadd.f32 %v133, %v71
    %vm137 = vcmask 57344
    %v138 = vsel %vm137, %v136, -inf
    %139 = vmax.xlane.f32.xlu0 %v138
    %v140 = vpop.xlane.xlu0 %139
    %v141 = vsub.f32 %v136, %v140
    %v142 = vmul.f32 %v141, 1.442695
    %v143 = vpow.pop %v142
    %v144 = vsel %vm137, %v143, 0.0
    %145 = vadd.xlane.f32.xlu0 %v144
    %v146 = vpop.xlane.xlu0 %145
    %v147 = vrcp.pop %v146
    %v148 = vmul.f32 %v143, %v147
    %149 = vst.msk [vmem:[#allocation7] sm:$0x1] %vm137, %v148
    %vm150 = vcmask 64512
    %v152 = vsel %vm150, %v148, 0
    %154 = vmatpush.msra.mxu0 0.0
    %155 = vmatpush.msra.mxu0 0.0
    %156 = vmatpush.msra.mxu0 0.0
    %157 = vmatpush.msra.mxu0 0.0
    %158 = vmatpush.msra.mxu0 0.0
    %159 = vmatpush.msra.mxu0 0.0
    %160 = vmatpush.msra.mxu0 0.0
    %161 = vmatpush.msra.mxu0 0.0
    %162 = vmatpush.msra.mxu0 0.0
    %163 = vmatpush.msra.mxu0 0.0
    %164 = vmatpush.msra.mxu0 0.0
    %165 = vmatpush.msra.mxu0 0.0
    %166 = vmatpush.msra.mxu0 0.0
    %167 = vmatpush.msra.mxu0 0.0
    %168 = vmatpush.msra.mxu0 0.0
    %169 = vmatpush.msra.mxu0 %v42
    %170 = vmatmul.f32.gmra.mxu0 %v152
    %v171 = vpop.f32.mrf.mxu0
    %v172 = vadd.f32 0.0, %v171
    %173 = vdwg.mxu0
    %v174 = vpack.c.bf16 %v172, %v172
    %v179 = vunpack.c.l.b16 %v55
    %v180 = vunpack.c.l.b16 %v56
    %v181 = vunpack.c.l.b16 %v57
    %v182 = vunpack.c.l.b16 %v58
    %v183 = vpack.c.b16 %v180, %v179
    %v184 = vpack.c.b16 %v182, %v181
    %v188 = vsel %vm91, %v174, 0
    %190 = vmatpush.bf16.msra.mxu0 0
    %191 = vmatpush.bf16.msra.mxu0 0
    %192 = vmatpush.bf16.msra.mxu0 0
    %193 = vmatpush.bf16.msra.mxu0 0
    %194 = vmatpush.bf16.msra.mxu0 0
    %195 = vmatpush.bf16.msra.mxu0 0
    %196 = vmatpush.bf16.msra.mxu0 %v184
    %197 = vmatpush.bf16.msra.mxu0 %v183
    %198 = vmatmul.bf16.gmra.mxu0 %v188
    %v199 = vpop.f32.mrf.mxu0
    %v200 = vadd.f32 0.0, %v199
    %v201 = vpop.f32.mrf.mxu0
    %202 = vdwg.mxu0
    %v207 = vunpack.c.l.b16 %v51
    %v208 = vunpack.c.l.b16 %v52
    %v209 = vunpack.c.l.b16 %v53
    %v210 = vunpack.c.l.b16 %v54
    %v211 = vpack.c.b16 %v208, %v207
    %v212 = vpack.c.b16 %v210, %v209
    %215 = vmatpush.bf16.msra.mxu0 0
    %216 = vmatpush.bf16.msra.mxu0 0
    %217 = vmatpush.bf16.msra.mxu0 0
    %218 = vmatpush.bf16.msra.mxu0 0
    %219 = vmatpush.bf16.msra.mxu0 0
    %220 = vmatpush.bf16.msra.mxu0 0
    %221 = vmatpush.bf16.msra.mxu0 %v212
    %222 = vmatpush.bf16.msra.mxu0 %v211
    %223 = vmatmul.bf16.gmra.mxu0 %v121
    %v224 = vpop.f32.mrf.mxu0
    %v225 = vadd.f32 %v200, %v224
    %v226 = vpop.f32.mrf.mxu0
    %227 = vdwg.mxu0
    %v228 = vadd.f32 %v225, %v72
    %v229 = vmax.f32 %v228, 0.0
    %v230 = vpack.c.bf16 %v229, %v229
    %v235 = vunpack.c.l.b16 %v59
    %v236 = vunpack.c.l.b16 %v60
    %v237 = vunpack.c.l.b16 %v61
    %v238 = vunpack.c.l.b16 %v62
    %v239 = vpack.c.b16 %v236, %v235
    %v240 = vpack.c.b16 %v238, %v237
    %v244 = vsel %vm91, %v230, 0
    %246 = vmatpush.bf16.msra.mxu0 0
    %247 = vmatpush.bf16.msra.mxu0 0
    %248 = vmatpush.bf16.msra.mxu0 0
    %249 = vmatpush.bf16.msra.mxu0 0
    %250 = vmatpush.bf16.msra.mxu0 0
    %251 = vmatpush.bf16.msra.mxu0 0
    %252 = vmatpush.bf16.msra.mxu0 %v240
    %253 = vmatpush.bf16.msra.mxu0 %v239
    %254 = vmatmul.bf16.gmra.mxu0 %v244
    %v255 = vpop.f32.mrf.mxu0
    %v256 = vadd.f32 %v73, %v255
    %v257 = vpop.f32.mrf.mxu0
    %258 = vdwg.mxu0
    %v263 = vunpack.c.l.b16 %v63
    %v264 = vunpack.c.l.b16 %v64
    %v265 = vunpack.c.l.b16 %v65
    %v266 = vunpack.c.l.b16 %v66
    %v267 = vpack.c.b16 %v264, %v263
    %v268 = vpack.c.b16 %v266, %v265
    %271 = vmatpush.bf16.msra.mxu0 0
    %272 = vmatpush.bf16.msra.mxu0 0
    %273 = vmatpush.bf16.msra.mxu0 0
    %274 = vmatpush.bf16.msra.mxu0 0
    %275 = vmatpush.bf16.msra.mxu0 0
    %276 = vmatpush.bf16.msra.mxu0 0
    %277 = vmatpush.bf16.msra.mxu0 %v268
    %278 = vmatpush.bf16.msra.mxu0 %v267
    %279 = vmatmul.bf16.gmra.mxu0 %v93
    %v280 = vpop.f32.mrf.mxu0
    %v281 = vadd.f32 %v74, %v280
    %v282 = vpop.f32.mrf.mxu0
    %283 = vdwg.mxu0
    %v284 = vadd.f32 %v256, %v281
    %v285 = vsub.f32 0.0, %v284
    %v286 = vmul.f32 %v285, 1.442695
    %v287 = vpow.pop %v286
    %v288 = vadd.f32 %v287, 1.0
    %v289 = vrcp.pop %v288
    %v290 = vmul.f32 %v288, %v289
    %v291 = vsub.f32 1.0, %v290
    %v292 = vmul.f32 %v289, %v291
    %v293 = vadd.f32 %v289, %v292
    %vm294 = vweird.f32 %v288
    %vm295 = vweird.f32 %v289
    %vm296 = vmor %vm294, %vm295
    %v297 = vsel %vm296, %v289, %v293
    %v298 = vand.u32 2147483647, %v288
    %vm299 = vcmp.eq.f32.partialorder %v298, 8.507059e+37
    %v300 = vand.u32 %v288, 2147483648
    %v301 = vor.u32 1.1754944e-38, %v300
    %v302 = vsel %vm299, %v301, %v297
    %v303 = vmul.f32 1.0, %v302
    %305 = vrot.lane.b32.xlu0 %v281, 64
    %v306 = vpop.permute.xlu0 %305
    %v308 = vmul.f32 %v303, %v306
    %310 = vrot.lane.b32.xlu0 %v308, 64
    %v311 = vpop.permute.xlu0 %310
    %v313 = vadd.f32 %v256, %v311
    %v314 = vtanh.pop %v313
    %v315 = vsub.f32 1.0, %v303
    %317 = vrot.lane.b32.xlu0 %v314, 96
    %v318 = vpop.permute.xlu0 %317
    %v320 = vmul.f32 %v315, %v318
    %v322 = vperm.slane %v76, 0
    %323 = vrot.lane.b32.xlu0 %v322, 32
    %v324 = vpop.permute.xlu0 %323
    %v326 = vmul.f32 %v303, %v324
    %v327 = vadd.f32 %v320, %v326
    %329 = vrot.lane.b32.xlu0 %v327, 96
    %v330 = vpop.permute.xlu0 %329
    %vm332 = vcmask 253952
    %333 = vst.msk [vmem:[#allocation5] sm:$0x1] %vm332, %v330
    %v334 = vpack.c.bf16 %v327, %v327
    %336 = vrot.lane.b32.xlu0 %v334, 96
    %v337 = vpop.permute.xlu0 %336
    %v342 = vunpack.c.l.b16 %v67
    %v343 = vunpack.c.l.b16 %v68
    %v344 = vunpack.c.l.b16 %v69
    %v345 = vunpack.c.l.b16 %v70
    %v346 = vpack.c.b16 %v343, %v342
    %v347 = vpack.c.b16 %v345, %v344
    %v351 = vsel %vm91, %v337, 0
    %353 = vmatpush.bf16.msra.mxu0 0
    %354 = vmatpush.bf16.msra.mxu0 0
    %355 = vmatpush.bf16.msra.mxu0 0
    %356 = vmatpush.bf16.msra.mxu0 0
    %357 = vmatpush.bf16.msra.mxu0 0
    %358 = vmatpush.bf16.msra.mxu0 0
    %359 = vmatpush.bf16.msra.mxu0 %v347
    %360 = vmatpush.bf16.msra.mxu0 %v346
    %361 = vmatmul.bf16.gmra.mxu0 %v351
    %v362 = vpop.f32.mrf.mxu0
    %v363 = vadd.f32 %v75, %v362
    %v364 = vpop.f32.mrf.mxu0
    %365 = vdwg.mxu0
    %vm366 = vcmask 1040384
    %v367 = vsel %vm366, %v363, -inf
    %368 = vmax.xlane.f32.xlu0 %v367
    %v369 = vpop.xlane.xlu0 %368
    %v370 = vsub.f32 %v363, %v369
    %v371 = vmul.f32 %v370, 1.442695
    %v372 = vpow.pop %v371
    %v373 = vsel %vm366, %v372, 0.0
    %374 = vadd.xlane.f32.xlu0 %v373
    %v375 = vpop.xlane.xlu0 %374
    %v376 = vlog2.pop %v375
    %v377 = vmul.f32 %v376, 0.6931472
    %v378 = vadd.f32 %v377, %v369
    %v379 = vsub.f32 %v363, %v378
    %380 = vst [vmem:[#allocation3] sm:$0x1] %v379
    %381 = vst.msk [vmem:[#allocation2] sm:$0x1] %vm332, %v330
    // Predicated region
    $region38: #{tpu_custom_call.1} parent=1 // pred_check
      _
    $region39: #{tpu_custom_call.1} parent=1 // pred_check_branch
      %383 = sbr.rel (0) target = $region41
    $region40: #{tpu_custom_call.1} parent=1 // pred_region
      %385 = vsyncadd [#allocation4], 0
      %s387 = sshll.u32 [#allocation3], 4
      %s388 = int_to_ptr.vmem [resolvable:$true] %s387
      %s389 = sshll.u32 %s8, 4
      %s390 = int_to_ptr.hbm [resolvable:$true] %s389
      %392 = dma.vmem_to_hbm [thread:$0]  %s388, 16, %s390, [#allocation4]
    $region41: #{tpu_custom_call.1} parent=1 // pred_fallthru
      _
    // Predicated region
    $region42: #{tpu_custom_call.1} parent=1 // pred_check
      _
    $region43: #{tpu_custom_call.1} parent=1 // pred_check_branch
      %394 = sbr.rel (0) target = $region45
    $region44: #{tpu_custom_call.1} parent=1 // pred_region
      %396 = vsyncadd [#allocation6], 0
      %s398 = sshll.u32 [#allocation5], 4
      %s399 = int_to_ptr.vmem [resolvable:$true] %s398
      %s400 = sshll.u32 %s9, 4
      %s401 = int_to_ptr.hbm [resolvable:$true] %s400
      %403 = dma.vmem_to_hbm [thread:$0]  %s399, 16, %s401, [#allocation6]
    $region45: #{tpu_custom_call.1} parent=1 // pred_fallthru
      _
    // Predicated region
    $region46: #{tpu_custom_call.1} parent=1 // pred_check
      _
    $region47: #{tpu_custom_call.1} parent=1 // pred_check_branch
      %405 = sbr.rel (0) target = $region49
    $region48: #{tpu_custom_call.1} parent=1 // pred_region
      %407 = vsyncadd [#allocation6], 0
      %s409 = sshll.u32 [#allocation7], 4
      %s410 = int_to_ptr.vmem [resolvable:$true] %s409
      %s411 = sshll.u32 %s10, 4
      %s412 = int_to_ptr.hbm [resolvable:$true] %s411
      %414 = dma.vmem_to_hbm [thread:$0]  %s410, 16, %s412, [#allocation6]
    $region49: #{tpu_custom_call.1} parent=1 // pred_fallthru
      _
    // Predicated region
    $region50: #{tpu_custom_call.1} parent=1 // pred_check
      _
    $region51: #{tpu_custom_call.1} parent=1 // pred_check_branch
      %416 = sbr.rel (0) target = $region53
    $region52: #{tpu_custom_call.1} parent=1 // pred_region
      %418 = dma.done [#allocation4], 16
    $region53: #{tpu_custom_call.1} parent=1 // pred_fallthru
      _
    // Predicated region
    $region54: #{tpu_custom_call.1} parent=1 // pred_check
      _
    $region55: #{tpu_custom_call.1} parent=1 // pred_check_branch
      %420 = sbr.rel (0) target = $region57
    $region56: #{tpu_custom_call.1} parent=1 // pred_region
      %422 = dma.done [#allocation6], 16
    $region57: #{tpu_custom_call.1} parent=1 // pred_fallthru
      _
    // Predicated region
    $region58: #{tpu_custom_call.1} parent=1 // pred_check
      _
    $region59: #{tpu_custom_call.1} parent=1 // pred_check_branch
      %424 = sbr.rel (0) target = $region61
    $region60: #{tpu_custom_call.1} parent=1 // pred_region
      %426 = dma.done [#allocation6], 16
    $region61: #{tpu_custom_call.1} parent=1 // pred_fallthru
      _
    %427 = vsyncpa [#allocation4], 1
    %428 = vsyncpa [#allocation6], 1

</llo_original>
